<compile_context>
chip_gen: v7x
topology: tpu7x:2x2x1
jax: 0.10.0
libtpu: 0.0.40
codegen_flags: <defaults>
</compile_context>

<pallas_src>
import functools

import jax
import jax.numpy as jnp
from jax.experimental import pallas as pl
from jax.experimental.pallas import tpu as pltpu

_LANES = 128
_SUBLANES = 8
_OUT_REPL = _SUBLANES * _LANES  # each tile's partial sum is replicated over (8,128)


def _row_granularity(itemsize: int) -> int:
    # Native sublane tiling: f32 -> 8 rows, bf16 -> 16, int8 -> 32.
    return max(_SUBLANES, 32 // max(1, itemsize))


def _tpu_vmem_capacity_bytes() -> int:
    """Best-effort physical VMEM query; falls back to the 128 MiB (v5e/v6e) value."""
    try:
        info = pltpu.get_tpu_info()
        cap = getattr(info, "vmem_capacity_bytes", None)
        if cap:
            return int(cap)
    except Exception:
        pass
    return 128 * 1024 * 1024


def _pick_block_rows(n_rows: int, n_cols: int, itemsize: int,
                     target_bytes: int) -> int:
    g = _row_granularity(itemsize)
    tb = target_bytes // max(1, n_cols * itemsize)
    tb = max(g, (tb // g) * g)
    padded_rows = int(pl.cdiv(n_rows, g)) * g
    return int(min(tb, padded_rows))


def _kldiv_tile_kernel(student_ref, teacher_ref, partial_ref, *,
                       inv_temp: float, batch: int, block_rows: int,
                       mask_rows: bool, use_mxu: bool):
    inv_t = jnp.float32(inv_temp)
    # Load (possibly bf16) tiles, promote to f32, fold the 1/T into one vmul.
    s = student_ref[...].astype(jnp.float32) * inv_t
    t = teacher_ref[...].astype(jnp.float32) * inv_t

    if mask_rows:
        # Last tile may extend past the real batch; Pallas gives no guarantee
        # on out-of-bounds block contents, so zero the logits of invalid rows.
        # Zero logits => uniform student == uniform teacher => exactly 0 KL.
        row = jax.lax.broadcasted_iota(jnp.int32, (block_rows, 1), 0)
        valid = (row + pl.program_id(0) * block_rows) < batch
        s = jnp.where(valid, s, 0.0)
        t = jnp.where(valid, t, 0.0)

    # Row maxes stay on the VPU/XLU.
    s_shift = s - jnp.max(s, axis=-1, keepdims=True)
    t_shift = t - jnp.max(t, axis=-1, keepdims=True)
    t_exp = jnp.exp(t_shift)

    if use_mxu:
        # Offload lane-axis reductions to the otherwise-idle MXU.
        ones = jnp.ones((s.shape[-1], _LANES), dtype=jnp.float32)

        def _rowsum(x):
            return jnp.dot(x, ones, preferred_element_type=jnp.float32)[:, :1]
    else:
        def _rowsum(x):
            return jnp.sum(x, axis=-1, keepdims=True)

    s_sum = _rowsum(jnp.exp(s_shift))                  # (TB, 1)
    t_sum = _rowsum(t_exp)                             # (TB, 1)
    dot_row = _rowsum(t_exp * (t_shift - s_shift))     # (TB, 1)

    # Per-row reciprocal on the EUP (its own VLIW slot) + one Newton step for
    # f32 accuracy — only TB of these per tile.
    r = pl.reciprocal(t_sum, approx=True)
    r = r * (jnp.float32(2.0) - t_sum * r)

    # row_kl = sum_c p_t * (log p_t - log p_s), regrouped so the per-row
    # constants fold in once per row and no (TB, C) log_p_s slab is built.
    row_kl = dot_row * r + (jnp.log(s_sum) - jnp.log(t_sum))

    tile_sum = jnp.sum(row_kl)
    # Full (8, 128) vreg write: unmasked vst; wrapper divides by 8*128.
    partial_ref[...] = jnp.broadcast_to(tile_sum, partial_ref.shape)


def kldiv_loss(student_logits, teacher_logits, temp: float = 4.0, *,
               block_rows: int | None = None, use_mxu_sums: bool | None = None):
    """Pallas equivalent of KLDivLoss(temp)(student_logits, teacher_logits).

    student_logits, teacher_logits: (B, C) arrays (f32 or bf16). Returns f32 scalar.
    """
    assert student_logits.shape == teacher_logits.shape
    assert student_logits.ndim == 2
    B, C = student_logits.shape
    itemsize = jnp.dtype(student_logits.dtype).itemsize
    g = _row_granularity(itemsize)

    vmem_cap = _tpu_vmem_capacity_bytes()
    small_vmem = vmem_cap <= 64 * 1024 * 1024          # v7x-class part
    if use_mxu_sums is None:
        use_mxu_sums = small_vmem                       # MXU idle; VALU-bound on v7x

    # Per-input tile target: big tiles on 128 MiB-VMEM parts, smaller on v7x.
    target_bytes = (3 * 1024 * 1024) // 2 if small_vmem else 4 * 1024 * 1024
    tb = (block_rows if block_rows is not None
          else _pick_block_rows(B, C, itemsize, target_bytes))
    tb = max(g, (int(tb) // g) * g)
    padded_rows = int(pl.cdiv(B, g)) * g
    tb = min(tb, padded_rows)
    if small_vmem and padded_rows >= 2 * g:
        # Guarantee >= 2 batch tiles so both v7x TensorCores get work.
        tb = min(tb, max(g, ((padded_rows // 2) // g) * g))

    n_tiles = int(pl.cdiv(B, tb))
    needs_mask = (B % tb) != 0   # only compile the mask selects when ragged

    # VMEM budget from actual need: 2 inputs x 2 pipeline buffers + a generous
    # bound on live (TB, C) f32 temporaries, clamped under physical capacity.
    in_bytes = 2 * 2 * tb * C * itemsize
    tmp_bytes = 8 * tb * C * 4
    vmem_limit = int(min(max(in_bytes + tmp_bytes + 4 * 1024 * 1024,
                             32 * 1024 * 1024),
                         vmem_cap - 8 * 1024 * 1024))

    kernel = functools.partial(
        _kldiv_tile_kernel,
        inv_temp=1.0 / float(temp), batch=B, block_rows=tb,
        mask_rows=needs_mask, use_mxu=bool(use_mxu_sums))

    cost = pl.CostEstimate(
        flops=8 * B * C,
        transcendentals=2 * B * C,
        bytes_accessed=2 * B * C * itemsize + n_tiles * _OUT_REPL * 4,
    )

    partials = pl.pallas_call(
        kernel,
        out_shape=jax.ShapeDtypeStruct((_SUBLANES * n_tiles, _LANES), jnp.float32),
        grid=(n_tiles,),
        in_specs=[
            pl.BlockSpec((tb, C), lambda i: (i, 0)),
            pl.BlockSpec((tb, C), lambda i: (i, 0)),
        ],
        out_specs=pl.BlockSpec((_SUBLANES, _LANES), lambda i: (i, 0)),
        compiler_params=pltpu.CompilerParams(
            dimension_semantics=("parallel",),
            vmem_limit_bytes=vmem_limit,
        ),
        cost_estimate=cost,
    )(student_logits, teacher_logits)

    # batchmean over the ORIGINAL batch, times T^2; fold in the (8*128)
    # replication of each tile's partial sum so no lane-0 gather is needed.
    scale = jnp.float32(float(temp) * float(temp) / (B * _OUT_REPL))
    return jnp.sum(partials) * scale


def _kldiv_ref(student_logits, teacher_logits, temp: float = 4.0):
    """Plain-JAX reference matching the PyTorch module."""
    s = student_logits.astype(jnp.float32) / temp
    t = teacher_logits.astype(jnp.float32) / temp
    log_p_s = jax.nn.log_softmax(s, axis=1)
    p_t = jax.nn.softmax(t, axis=1)
    log_p_t = jax.nn.log_softmax(t, axis=1)
    kl = p_t * (log_p_t - log_p_s)
    return jnp.sum(kl) / student_logits.shape[0] * (temp ** 2)


if __name__ == "__main__":
    key = jax.random.PRNGKey(0)
    k1, k2, k3, k4 = jax.random.split(key, 4)

    # Case 1: f32 logits, aligned batch (no in-kernel mask path).
    B, C = 8, 128
    s32 = jax.random.normal(k1, (B, C), dtype=jnp.float32) * 2.0
    t32 = jax.random.normal(k2, (B, C), dtype=jnp.float32) * 2.0
    loss = jax.block_until_ready(kldiv_loss(s32, t32, temp=4.0))
    ref = _kldiv_ref(s32, t32, temp=4.0)
    assert jnp.allclose(loss, ref, rtol=1e-3, atol=1e-4), (loss, ref)

    # Case 2: bf16 logits, ragged batch (20 % 16 != 0) -> multi-tile grid with
    # in-kernel masking of the partial last tile (no wrapper-side jnp.pad).
    B2, C2 = 20, 256
    s16 = (jax.random.normal(k3, (B2, C2), dtype=jnp.float32) * 2.0).astype(jnp.bfloat16)
    t16 = (jax.random.normal(k4, (B2, C2), dtype=jnp.float32) * 2.0).astype(jnp.bfloat16)
    loss2 = jax.block_until_ready(kldiv_loss(s16, t16, temp=4.0, block_rows=16))
    ref2 = _kldiv_ref(s16, t16, temp=4.0)
    assert jnp.allclose(loss2, ref2, rtol=1e-3, atol=1e-3), (loss2, ref2)

    # Case 3: explicitly exercise the MXU row-sum offload path (v7x default).
    loss3 = jax.block_until_ready(kldiv_loss(s32, t32, temp=2.0, use_mxu_sums=True))
    ref3 = _kldiv_ref(s32, t32, temp=2.0)
    assert jnp.allclose(loss3, ref3, rtol=1e-3, atol=1e-4), (loss3, ref3)

    print("KERNEL_OK")
</pallas_src>

<mosaic_0001>
module attributes {stable_mosaic.version = 11 : i64} {
  func.func @_kldiv_tile_kernel(%arg0: i32, %arg1: memref<8x128xf32, #tpu.memory_space<vmem>>, %arg2: memref<8x128xf32, #tpu.memory_space<vmem>>, %arg3: memref<8x128xf32, #tpu.memory_space<vmem>>) attributes {dimension_semantics = [#tpu.dimension_semantics<parallel>], iteration_bounds = array<i64: 1>, scalar_prefetch = 0 : i64, scratch_operands = 0 : i64, tpu.core_type = #tpu.core_type<tc>, window_params = [{transform_indices = @transform_0, window_bounds = array<i64: 8, 128>}, {transform_indices = @transform_1, window_bounds = array<i64: 8, 128>}, {transform_indices = @transform_2, window_bounds = array<i64: 8, 128>}]} {
    %c0 = arith.constant 0 : index
    %c0_0 = arith.constant 0 : index
    %0 = vector.load %arg1[%c0, %c0_0] : memref<8x128xf32, #tpu.memory_space<vmem>>, vector<8x128xf32>
    %cst = arith.constant 2.500000e-01 : f32
    %1 = vector.broadcast %cst : f32 to vector<8x128xf32>
    %2 = arith.mulf %0, %1 : vector<8x128xf32>
    %c0_1 = arith.constant 0 : index
    %c0_2 = arith.constant 0 : index
    %3 = vector.load %arg2[%c0_1, %c0_2] : memref<8x128xf32, #tpu.memory_space<vmem>>, vector<8x128xf32>
    %cst_3 = arith.constant 2.500000e-01 : f32
    %4 = vector.broadcast %cst_3 : f32 to vector<8x128xf32>
    %5 = arith.mulf %3, %4 : vector<8x128xf32>
    %cst_4 = arith.constant dense<0xFF800000> : vector<8xf32>
    %6 = vector.multi_reduction <maximumf>, %2, %cst_4 [1] : vector<8x128xf32> to vector<8xf32>
    %7 = vector.shape_cast %6 : vector<8xf32> to vector<8x1xf32>
    %8 = vector.broadcast %7 : vector<8x1xf32> to vector<8x128xf32>
    %9 = arith.subf %2, %8 : vector<8x128xf32>
    %cst_5 = arith.constant dense<0xFF800000> : vector<8xf32>
    %10 = vector.multi_reduction <maximumf>, %5, %cst_5 [1] : vector<8x128xf32> to vector<8xf32>
    %11 = vector.shape_cast %10 : vector<8xf32> to vector<8x1xf32>
    %12 = vector.broadcast %11 : vector<8x1xf32> to vector<8x128xf32>
    %13 = arith.subf %5, %12 : vector<8x128xf32>
    %14 = math.exp %13 : vector<8x128xf32>
    %15 = math.exp %9 : vector<8x128xf32>
    %cst_6 = arith.constant dense<0.000000e+00> : vector<8xf32>
    %16 = vector.multi_reduction <add>, %15, %cst_6 [1] : vector<8x128xf32> to vector<8xf32>
    %17 = vector.shape_cast %16 : vector<8xf32> to vector<8x1xf32>
    %cst_7 = arith.constant dense<0.000000e+00> : vector<8xf32>
    %18 = vector.multi_reduction <add>, %14, %cst_7 [1] : vector<8x128xf32> to vector<8xf32>
    %19 = vector.shape_cast %18 : vector<8xf32> to vector<8x1xf32>
    %20 = arith.subf %13, %9 : vector<8x128xf32>
    %21 = arith.mulf %14, %20 : vector<8x128xf32>
    %cst_8 = arith.constant dense<0.000000e+00> : vector<8xf32>
    %22 = vector.multi_reduction <add>, %21, %cst_8 [1] : vector<8x128xf32> to vector<8xf32>
    %23 = vector.shape_cast %22 : vector<8xf32> to vector<8x1xf32>
    %24 = tpu.reciprocal %19 {approx = true} : vector<8x1xf32> -> vector<8x1xf32>
    %25 = arith.mulf %19, %24 : vector<8x1xf32>
    %cst_9 = arith.constant 2.000000e+00 : f32
    %26 = vector.broadcast %cst_9 : f32 to vector<8x1xf32>
    %27 = arith.subf %26, %25 : vector<8x1xf32>
    %28 = arith.mulf %24, %27 : vector<8x1xf32>
    %29 = arith.mulf %23, %28 : vector<8x1xf32>
    %30 = math.log %17 : vector<8x1xf32>
    %31 = math.log %19 : vector<8x1xf32>
    %32 = arith.subf %30, %31 : vector<8x1xf32>
    %33 = arith.addf %29, %32 : vector<8x1xf32>
    %34 = vector.shape_cast %33 : vector<8x1xf32> to vector<1x8x1xf32>
    %cst_10 = arith.constant dense<0.000000e+00> : vector<1xf32>
    %35 = vector.multi_reduction <add>, %34, %cst_10 [1, 2] : vector<1x8x1xf32> to vector<1xf32>
    %36 = vector.shape_cast %35 : vector<1xf32> to vector<1x1x1xf32>
    %37 = vector.extract %36[0, 0, 0] : f32 from vector<1x1x1xf32>
    %38 = vector.broadcast %37 : f32 to vector<8x128xf32>
    %c0_11 = arith.constant 0 : index
    %c0_12 = arith.constant 0 : index
    %39 = vector.load %arg3[%c0_11, %c0_12] : memref<8x128xf32, #tpu.memory_space<vmem>>, vector<8x128xf32>
    tpu.vector_store %arg3[%c0_11, %c0_12], %38 {strides = array<i32>} : memref<8x128xf32, #tpu.memory_space<vmem>>, vector<8x128xf32>,
    return
  }
  func.func @transform_0(%arg0: i32) -> (i32, i32) {
    %c0_i32 = arith.constant 0 : i32
    %c0_i32_0 = arith.constant 0 : i32
    return %arg0, %c0_i32 : i32, i32
  }
  func.func @transform_1(%arg0: i32) -> (i32, i32) {
    %c0_i32 = arith.constant 0 : i32
    %c0_i32_0 = arith.constant 0 : i32
    return %arg0, %c0_i32 : i32, i32
  }
  func.func @transform_2(%arg0: i32) -> (i32, i32) {
    %c0_i32 = arith.constant 0 : i32
    %c0_i32_0 = arith.constant 0 : i32
    return %arg0, %c0_i32 : i32, i32
  }
}

</mosaic_0001>

<llo_original>
// kernel: tpu_custom_call.1
$region0: #{tpu_custom_call.1}
  #allocation0 [shape = 'u32[]', space=smem, size = 0x4, offset = 0x4, fixed_abs, tag = 'smem constant byte address 0x4 - core index']
  #allocation1 [shape = 'u32[144,128]{1,0:T(1,128)}', space=vmem, size = 0x12000, scoped, tag = 'internal scratch']
  %s0 = inlined_call_operand.hbm [shape: f32[8,128], index: 0, kind: input, shape index: {}]
  %s1 = inlined_call_operand.hbm [shape: f32[8,128], index: 1, kind: input, shape index: {}]
  %s2 = inlined_call_operand.hbm [shape: f32[8,128], index: 2, kind: output, shape index: {}]
  %s3 = sld [smem:[#allocation0]]
  $region26: #{tpu_custom_call.1} parent=0
    _
  %s5 = ssub.s32 1, %s3
  %s6 = scalar_select 0, %s5, %s3
  $region1: #{tpu_custom_call.1} parent=0
    #allocation2 [shape = 'u8[4096]{0}', space=vmem, size = 0x1000, scoped, tag = 'input window, operand 0, single buffered']
    #allocation3 [shape = 's32[1]{0}', space=sflag, size = 0x4, scoped, tag = 'scoped memory for tpu_custom_call.1']
    #allocation4 [shape = 's32[1]{0}', space=sflag, size = 0x4, scoped, tag = 'scoped memory for tpu_custom_call.1']
    #allocation5 [shape = 'u8[4096]{0}', space=vmem, size = 0x1000, scoped, tag = 'input window, operand 1, single buffered']
    #allocation6 [shape = 's32[1]{0}', space=sflag, size = 0x4, scoped, tag = 'scoped memory for tpu_custom_call.1']
    #allocation7 [shape = 'u8[4096]{0}', space=vmem, size = 0x1000, scoped, tag = 'output window, operand 0, single buffered']
    %7 = vsyncpa [#allocation3], 0
    %8 = vsyncpa [#allocation6], 0
    %9 = vsyncpa [#allocation4], 0
    // Predicated region
    $region2: #{tpu_custom_call.1} parent=1 // pred_check
      _
    $region3: #{tpu_custom_call.1} parent=1 // pred_check_branch
      %11 = sbr.rel (0) target = $region5
    $region4: #{tpu_custom_call.1} parent=1 // pred_region
      %s13 = ssub.s32 128, 128
      %14 = vsyncadd [#allocation3], %s13
      %s16 = sshll.u32 [#allocation2], 4
      %s17 = int_to_ptr.vmem [resolvable:$true] %s16
      %19 = dma.hbm_to_vmem [thread:$0]  %s0, 128, %s17, [#allocation3]
    $region5: #{tpu_custom_call.1} parent=1 // pred_fallthru
      _
    // Predicated region
    $region6: #{tpu_custom_call.1} parent=1 // pred_check
      _
    $region7: #{tpu_custom_call.1} parent=1 // pred_check_branch
      %21 = sbr.rel (0) target = $region9
    $region8: #{tpu_custom_call.1} parent=1 // pred_region
      %s23 = ssub.s32 128, 128
      %24 = vsyncadd [#allocation6], %s23
      %s26 = sshll.u32 [#allocation5], 4
      %s27 = int_to_ptr.vmem [resolvable:$true] %s26
      %29 = dma.hbm_to_vmem [thread:$0]  %s1, 128, %s27, [#allocation6]
    $region9: #{tpu_custom_call.1} parent=1 // pred_fallthru
      _
    // Predicated region
    $region10: #{tpu_custom_call.1} parent=1 // pred_check
      _
    $region11: #{tpu_custom_call.1} parent=1 // pred_check_branch
      %31 = sbr.rel (0) target = $region13
    $region12: #{tpu_custom_call.1} parent=1 // pred_region
      %32 = dma.done [#allocation3], 128
    $region13: #{tpu_custom_call.1} parent=1 // pred_fallthru
      _
    // Predicated region
    $region14: #{tpu_custom_call.1} parent=1 // pred_check
      _
    $region15: #{tpu_custom_call.1} parent=1 // pred_check_branch
      %34 = sbr.rel (0) target = $region17
    $region16: #{tpu_custom_call.1} parent=1 // pred_region
      %35 = dma.done [#allocation6], 128
    $region17: #{tpu_custom_call.1} parent=1 // pred_fallthru
      _
    %v36 = vld [vmem:[#allocation2] sm:$0xff]
    %v37 = vmul.f32 %v36, 0.25
    %v38 = vld [vmem:[#allocation5] sm:$0xff]
    %v39 = vmul.f32 %v38, 0.25
    %40 = vmax.xlane.f32.xlu0 %v37
    %v41 = vpop.xlane.xlu0 %40
    %v42 = vsub.f32 %v37, %v41
    %43 = vmax.xlane.f32.xlu0 %v39
    %v44 = vpop.xlane.xlu0 %43
    %v45 = vsub.f32 %v39, %v44
    %v46 = vmul.f32 %v45, 1.442695
    %v47 = vpow.pop %v46
    %v48 = vmul.f32 %v42, 1.442695
    %v49 = vpow.pop %v48
    %50 = vadd.xlane.f32.xlu0 %v49
    %v51 = vpop.xlane.xlu0 %50
    %52 = vadd.xlane.f32.xlu0 %v47
    %v53 = vpop.xlane.xlu0 %52
    %v54 = vsub.f32 %v45, %v42
    %v55 = vmul.f32 %v47, %v54
    %56 = vadd.xlane.f32.xlu0 %v55
    %v57 = vpop.xlane.xlu0 %56
    %v58 = vrcp.pop %v53
    %v59 = vmul.f32 %v53, %v58
    %v60 = vsub.f32 2.0, %v59
    %v61 = vmul.f32 %v58, %v60
    %v62 = vmul.f32 %v57, %v61
    %v63 = vlog2.pop %v51
    %v64 = vmul.f32 %v63, 0.6931472
    %v65 = vlog2.pop %v53
    %v66 = vmul.f32 %v65, 0.6931472
    %v67 = vsub.f32 %v64, %v66
    %v68 = vadd.f32 %v62, %v67
    %vm69 = vcmask 7168
    %v70 = vsel %vm69, %v68, 0.0
    %71 = vadd.xlane.f32.xlu0 %v70
    %v72 = vpop.xlane.xlu0 %71
    %v73 = vrot.slane %v72, 4
    %v74 = vadd.f32 %v72, %v73
    %v75 = vrot.slane %v74, 2
    %v76 = vadd.f32 %v74, %v75
    %v77 = vrot.slane %v76, 1
    %v78 = vadd.f32 %v76, %v77
    %s79 = vtos %v78
    %v80 = vstv %s79
    %81 = vst [vmem:[#allocation7] sm:$0xff] %v80
    // Predicated region
    $region18: #{tpu_custom_call.1} parent=1 // pred_check
      _
    $region19: #{tpu_custom_call.1} parent=1 // pred_check_branch
      %83 = sbr.rel (0) target = $region21
    $region20: #{tpu_custom_call.1} parent=1 // pred_region
      %s85 = ssub.s32 128, 128
      %86 = vsyncadd [#allocation4], %s85
      %s88 = sshll.u32 [#allocation7], 4
      %s89 = int_to_ptr.vmem [resolvable:$true] %s88
      %91 = dma.vmem_to_hbm [thread:$0]  %s89, 128, %s2, [#allocation4]
    $region21: #{tpu_custom_call.1} parent=1 // pred_fallthru
      _
    // Predicated region
    $region22: #{tpu_custom_call.1} parent=1 // pred_check
      _
    $region23: #{tpu_custom_call.1} parent=1 // pred_check_branch
      %93 = sbr.rel (0) target = $region25
    $region24: #{tpu_custom_call.1} parent=1 // pred_region
      %94 = dma.done [#allocation4], 128
    $region25: #{tpu_custom_call.1} parent=1 // pred_fallthru
      _
    %95 = vsyncpa [#allocation3], 1
    %96 = vsyncpa [#allocation6], 1
    %97 = vsyncpa [#allocation4], 1

</llo_original>
